<compile_context>
chip_gen: v7x
topology: tpu7x:2x2x1
jax: 0.10.0
libtpu: 0.0.40
codegen_flags: <defaults>
</compile_context>

<pallas_src>
import functools

import jax
import jax.numpy as jnp
from jax.experimental import pallas as pl
from jax.experimental.pallas import tpu as pltpu

_SUBLANES = 8
_LANES = 128


def _ce_acc_kernel(logits_ref, tgt_ref, loss_ref, corr_ref):
    """Fused cross-entropy + token-accuracy partial reduction for one row tile.

    logits_ref : (TN, V)   source-dtype VMEM tile (cast to f32 in-kernel)
    tgt_ref    : (TN, 1)   int32 VMEM tile (padded rows hold -1)
    loss_ref   : (8, 128)  f32 per-core partial-sum block (scalar at [0, 0])
    corr_ref   : (8, 128)  f32 per-core partial-sum block (scalar at [0, 0])
    """
    i = pl.program_id(1)  # reduction ("arbitrary") axis

    @pl.when(i == 0)
    def _():
        loss_ref[...] = jnp.zeros_like(loss_ref)
        corr_ref[...] = jnp.zeros_like(corr_ref)

    logits = logits_ref[...].astype(jnp.float32)          # (TN, V)
    tgt = tgt_ref[...]                                     # (TN, 1) int32
    v = logits.shape[-1]

    # (1, V) iota; broadcasts against (TN, 1) / (TN, V) operands.
    vocab_ids = jax.lax.broadcasted_iota(jnp.int32, (1, v), 1)

    # --- cross entropy: logsumexp(logits) - logits[target] -----------------
    m = jnp.max(logits, axis=-1, keepdims=True)                              # (TN, 1)
    lse = m + jnp.log(jnp.sum(jnp.exp(logits - m), axis=-1, keepdims=True))  # (TN, 1)

    onehot = vocab_ids == tgt                                                # (TN, V)
    tgt_logit = jnp.sum(jnp.where(onehot, logits, 0.0), axis=-1, keepdims=True)

    valid = tgt >= 0                                                         # padded rows -> -1
    loss = jnp.where(valid, lse - tgt_logit, 0.0)                            # (TN, 1)

    # --- token accuracy: first-index argmax == target -----------------------
    is_max = logits == m
    argmax = jnp.min(jnp.where(is_max, vocab_ids, v), axis=-1, keepdims=True)  # (TN, 1)
    correct = (argmax == tgt).astype(jnp.float32)   # tgt == -1 never matches (argmax >= 0)

    loss_ref[0:1, 0:1] = loss_ref[0:1, 0:1] + jnp.sum(loss)
    corr_ref[0:1, 0:1] = corr_ref[0:1, 0:1] + jnp.sum(correct)


def _pick_row_tile(n_rows, vocab, itemsize):
    """Largest row tile keeping the double-buffered logits tile under ~12 MiB."""
    budget = 12 * 1024 * 1024
    tn = budget // (2 * vocab * max(int(itemsize), 1))
    tn = max(_SUBLANES, min(8192, int(tn)))
    n_ceil = ((n_rows + _SUBLANES - 1) // _SUBLANES) * _SUBLANES
    tn = min(tn, n_ceil)
    tn = max(_SUBLANES, (tn // _SUBLANES) * _SUBLANES)
    return tn


@functools.partial(jax.jit, static_argnames=("base_loss_weight",
                                             "reward_weight",
                                             "token_accuracy_weight"))
def enhanced_reward_aware_loss(outputs, targets,
                               base_loss_weight=0.2,
                               reward_weight=0.5,
                               token_accuracy_weight=0.3):
    """Tensor path of EnhancedRewardAwareLoss.forward (predictions=None, nmr_data=None)."""
    B, S, V = outputs.shape
    N = B * S

    # Keep logits in their source dtype through the DMA; cast in-kernel.
    logits2d = outputs.reshape(N, V)
    itemsize = outputs.dtype.itemsize

    TN = _pick_row_tile(N, V, itemsize)
    tiles = pl.cdiv(N, TN)
    NC = 2 if tiles >= 2 else 1            # megacore split (v7x); harmless on 1-TC chips
    tiles_padded = pl.cdiv(tiles, NC) * NC
    T = tiles_padded // NC
    N_pad = tiles_padded * TN

    # Pad targets with -1 so padded / out-of-range rows drop out of loss & accuracy.
    tgt_flat = targets.reshape(N).astype(jnp.int32)
    tgt2d = jnp.pad(tgt_flat, (0, N_pad - N), constant_values=-1).reshape(N_pad, 1)

    loss_parts, corr_parts = pl.pallas_call(
        _ce_acc_kernel,
        out_shape=(jax.ShapeDtypeStruct((NC * _SUBLANES, _LANES), jnp.float32),
                   jax.ShapeDtypeStruct((NC * _SUBLANES, _LANES), jnp.float32)),
        grid_spec=pltpu.PrefetchScalarGridSpec(
            num_scalar_prefetch=0,
            grid=(NC, T),
            in_specs=[
                pl.BlockSpec((TN, V), lambda c, i: (c * T + i, 0)),
                pl.BlockSpec((TN, 1), lambda c, i: (c * T + i, 0)),
            ],
            out_specs=[
                pl.BlockSpec((_SUBLANES, _LANES), lambda c, i: (c, 0)),
                pl.BlockSpec((_SUBLANES, _LANES), lambda c, i: (c, 0)),
            ],
        ),
        compiler_params=pltpu.CompilerParams(
            dimension_semantics=("parallel", "arbitrary"),
            vmem_limit_bytes=48 * 1024 * 1024),
    )(logits2d, tgt2d)

    loss_sum = jnp.sum(loss_parts)        # only [c*8, 0] entries are nonzero
    correct_sum = jnp.sum(corr_parts)

    base_loss = loss_sum / N              # CrossEntropyLoss(reduction='mean')
    token_accuracy = correct_sum / N      # mean(argmax == target)

    # graduated token-accuracy reward (same thresholds as the PyTorch module)
    reward = jnp.where(token_accuracy > 0.95, 8.0,
             jnp.where(token_accuracy > 0.90, 6.0,
             jnp.where(token_accuracy > 0.85, 4.0,
             jnp.where(token_accuracy > 0.80, 2.0,
             jnp.where(token_accuracy > 0.70, 1.0, 0.0)))))

    # normalized mixing weights (0.2 + 0.5 + 0.3 = 1.0, so unchanged)
    tw = base_loss_weight + reward_weight + token_accuracy_weight
    blw = base_loss_weight / tw
    rw = reward_weight / tw
    taw = token_accuracy_weight / tw

    token_accuracy_loss = -reward
    total_loss = (blw + rw) * base_loss + taw * token_accuracy_loss

    loss_components = {
        "base_loss": base_loss,
        "token_accuracy_score": token_accuracy,
        "token_accuracy_reward": reward,
        "reward_penalty_sum": jnp.float32(0.0),
    }
    return total_loss, loss_components


def _reference(outputs, targets,
               base_loss_weight=0.2, reward_weight=0.5, token_accuracy_weight=0.3):
    """Pure-JAX reference for correctness checking."""
    B, S, V = outputs.shape
    N = B * S
    logits = outputs.reshape(N, V).astype(jnp.float32)
    tgt = targets.reshape(N).astype(jnp.int32)
    logp = jax.nn.log_softmax(logits, axis=-1)
    base_loss = -jnp.mean(logp[jnp.arange(N), tgt])
    acc = jnp.mean((jnp.argmax(logits, axis=-1) == tgt).astype(jnp.float32))
    reward = jnp.where(acc > 0.95, 8.0,
             jnp.where(acc > 0.90, 6.0,
             jnp.where(acc > 0.85, 4.0,
             jnp.where(acc > 0.80, 2.0,
             jnp.where(acc > 0.70, 1.0, 0.0)))))
    tw = base_loss_weight + reward_weight + token_accuracy_weight
    total = ((base_loss_weight + reward_weight) / tw) * base_loss \
            + (token_accuracy_weight / tw) * (-reward)
    return total, base_loss, acc


if __name__ == "__main__":
    key = jax.random.PRNGKey(0)
    k1, k2, k3, k4 = jax.random.split(key, 4)

    # primary small shape
    B, S, V = 2, 8, 32  # batch, seq_len, vocab_size
    outputs = jax.random.normal(k1, (B, S, V), dtype=jnp.float32)
    targets = jax.random.randint(k2, (B, S), 0, V, dtype=jnp.int32)

    total_loss, comps = enhanced_reward_aware_loss(outputs, targets)
    total_loss = jax.block_until_ready(total_loss)

    ref_total, ref_base, ref_acc = _reference(outputs, targets)
    assert jnp.allclose(total_loss, ref_total, atol=1e-5), (total_loss, ref_total)
    assert jnp.allclose(comps["base_loss"], ref_base, atol=1e-5)
    assert jnp.allclose(comps["token_accuracy_score"], ref_acc, atol=1e-6)

    # second shape: B*S not a multiple of 8 exercises the padded/masked row path
    B2, S2, V2 = 3, 7, 32
    outputs2 = jax.random.normal(k3, (B2, S2, V2), dtype=jnp.float32)
    targets2 = jax.random.randint(k4, (B2, S2), 0, V2, dtype=jnp.int32)
    total2, comps2 = enhanced_reward_aware_loss(outputs2, targets2)
    total2 = jax.block_until_ready(total2)
    ref_total2, ref_base2, ref_acc2 = _reference(outputs2, targets2)
    assert jnp.allclose(total2, ref_total2, atol=1e-5), (total2, ref_total2)
    assert jnp.allclose(comps2["base_loss"], ref_base2, atol=1e-5)
    assert jnp.allclose(comps2["token_accuracy_score"], ref_acc2, atol=1e-6)

    print("KERNEL_OK")
</pallas_src>

<mosaic_0001>
module attributes {stable_mosaic.version = 11 : i64} {
  func.func @_ce_acc_kernel(%arg0: i32, %arg1: i32, %arg2: memref<16x32xf32, #tpu.memory_space<vmem>>, %arg3: memref<16x1xi32, #tpu.memory_space<vmem>>, %arg4: memref<8x128xf32, #tpu.memory_space<vmem>>, %arg5: memref<8x128xf32, #tpu.memory_space<vmem>>) attributes {dimension_semantics = [#tpu.dimension_semantics<parallel>, #tpu.dimension_semantics<arbitrary>], iteration_bounds = array<i64: 1, 1>, scalar_prefetch = 0 : i64, scratch_operands = 0 : i64, tpu.core_type = #tpu.core_type<tc>, window_params = [{transform_indices = @transform_0, window_bounds = array<i64: 16, 32>}, {transform_indices = @transform_1, window_bounds = array<i64: 16, 1>}, {transform_indices = @transform_2, window_bounds = array<i64: 8, 128>}, {transform_indices = @transform_3, window_bounds = array<i64: 8, 128>}]} {
    %c0_i32 = arith.constant 0 : i32
    %0 = arith.cmpi eq, %arg1, %c0_i32 : i32
    %1 = arith.extui %0 : i1 to i32
    %c0_i32_0 = arith.constant 0 : i32
    %2 = arith.cmpi ne, %1, %c0_i32_0 : i32
    scf.if %2 {
      %cst_20 = arith.constant 0.000000e+00 : f32
      %54 = vector.broadcast %cst_20 : f32 to vector<8x128xf32>
      %c0_21 = arith.constant 0 : index
      %c0_22 = arith.constant 0 : index
      %55 = vector.load %arg4[%c0_21, %c0_22] : memref<8x128xf32, #tpu.memory_space<vmem>>, vector<8x128xf32>
      tpu.vector_store %arg4[%c0_21, %c0_22], %54 {strides = array<i32>} : memref<8x128xf32, #tpu.memory_space<vmem>>, vector<8x128xf32>,
      %cst_23 = arith.constant 0.000000e+00 : f32
      %56 = vector.broadcast %cst_23 : f32 to vector<8x128xf32>
      %c0_24 = arith.constant 0 : index
      %c0_25 = arith.constant 0 : index
      %57 = vector.load %arg5[%c0_24, %c0_25] : memref<8x128xf32, #tpu.memory_space<vmem>>, vector<8x128xf32>
      tpu.vector_store %arg5[%c0_24, %c0_25], %56 {strides = array<i32>} : memref<8x128xf32, #tpu.memory_space<vmem>>, vector<8x128xf32>,
    } else {
    }
    %c0 = arith.constant 0 : index
    %c0_1 = arith.constant 0 : index
    %3 = vector.load %arg2[%c0, %c0_1] : memref<16x32xf32, #tpu.memory_space<vmem>>, vector<16x32xf32>
    %c0_2 = arith.constant 0 : index
    %c0_3 = arith.constant 0 : index
    %4 = vector.load %arg3[%c0_2, %c0_3] : memref<16x1xi32, #tpu.memory_space<vmem>>, vector<16x1xi32>
    %5 = tpu.iota {dimensions = array<i32: 1>} : vector<1x32xi32>
    %cst = arith.constant dense<0xFF800000> : vector<16xf32>
    %6 = vector.multi_reduction <maximumf>, %3, %cst [1] : vector<16x32xf32> to vector<16xf32>
    %7 = vector.shape_cast %6 : vector<16xf32> to vector<16x1xf32>
    %8 = vector.broadcast %7 : vector<16x1xf32> to vector<16x32xf32>
    %9 = arith.subf %3, %8 : vector<16x32xf32>
    %10 = math.exp %9 : vector<16x32xf32>
    %cst_4 = arith.constant dense<0.000000e+00> : vector<16xf32>
    %11 = vector.multi_reduction <add>, %10, %cst_4 [1] : vector<16x32xf32> to vector<16xf32>
    %12 = vector.shape_cast %11 : vector<16xf32> to vector<16x1xf32>
    %13 = math.log %12 : vector<16x1xf32>
    %14 = arith.addf %7, %13 : vector<16x1xf32>
    %15 = vector.broadcast %5 : vector<1x32xi32> to vector<16x32xi32>
    %16 = vector.broadcast %4 : vector<16x1xi32> to vector<16x32xi32>
    %17 = arith.cmpi eq, %15, %16 : vector<16x32xi32>
    %cst_5 = arith.constant 0.000000e+00 : f32
    %18 = vector.broadcast %cst_5 : f32 to vector<16x32xf32>
    %19 = arith.select %17, %3, %18 : vector<16x32xi1>, vector<16x32xf32>
    %cst_6 = arith.constant dense<0.000000e+00> : vector<16xf32>
    %20 = vector.multi_reduction <add>, %19, %cst_6 [1] : vector<16x32xf32> to vector<16xf32>
    %21 = vector.shape_cast %20 : vector<16xf32> to vector<16x1xf32>
    %c0_i32_7 = arith.constant 0 : i32
    %22 = vector.broadcast %c0_i32_7 : i32 to vector<16x1xi32>
    %23 = arith.cmpi sge, %4, %22 : vector<16x1xi32>
    %24 = arith.subf %14, %21 : vector<16x1xf32>
    %cst_8 = arith.constant 0.000000e+00 : f32
    %25 = vector.broadcast %cst_8 : f32 to vector<16x1xf32>
    %26 = arith.select %23, %24, %25 : vector<16x1xi1>, vector<16x1xf32>
    %27 = vector.broadcast %7 : vector<16x1xf32> to vector<16x32xf32>
    %28 = arith.cmpf oeq, %3, %27 : vector<16x32xf32>
    %c32_i32 = arith.constant 32 : i32
    %29 = vector.shape_cast %5 : vector<1x32xi32> to vector<1x32xi32>
    %30 = vector.broadcast %29 : vector<1x32xi32> to vector<16x32xi32>
    %31 = vector.broadcast %c32_i32 : i32 to vector<16x32xi32>
    %32 = arith.select %28, %30, %31 : vector<16x32xi1>, vector<16x32xi32>
    %cst_9 = arith.constant dense<2147483647> : vector<16xi32>
    %33 = vector.multi_reduction <minsi>, %32, %cst_9 [1] : vector<16x32xi32> to vector<16xi32>
    %34 = vector.shape_cast %33 : vector<16xi32> to vector<16x1xi32>
    %35 = arith.cmpi eq, %34, %4 : vector<16x1xi32>
    %36 = arith.extui %35 : vector<16x1xi1> to vector<16x1xi32>
    %37 = arith.sitofp %36 : vector<16x1xi32> to vector<16x1xf32>
    %c0_10 = arith.constant 0 : index
    %c0_11 = arith.constant 0 : index
    %38 = vector.load %arg4[%c0_10, %c0_11] : memref<8x128xf32, #tpu.memory_space<vmem>>, vector<1x1xf32>
    %39 = vector.shape_cast %26 : vector<16x1xf32> to vector<1x16x1xf32>
    %cst_12 = arith.constant dense<0.000000e+00> : vector<1xf32>
    %40 = vector.multi_reduction <add>, %39, %cst_12 [1, 2] : vector<1x16x1xf32> to vector<1xf32>
    %41 = vector.shape_cast %40 : vector<1xf32> to vector<1x1x1xf32>
    %42 = vector.extract %41[0, 0, 0] : f32 from vector<1x1x1xf32>
    %43 = vector.broadcast %42 : f32 to vector<1x1xf32>
    %44 = arith.addf %38, %43 : vector<1x1xf32>
    %c0_13 = arith.constant 0 : index
    %c0_14 = arith.constant 0 : index
    %45 = vector.load %arg4[%c0_13, %c0_14] : memref<8x128xf32, #tpu.memory_space<vmem>>, vector<1x1xf32>
    tpu.vector_store %arg4[%c0_13, %c0_14], %44 {strides = array<i32>} : memref<8x128xf32, #tpu.memory_space<vmem>>, vector<1x1xf32>,
    %c0_15 = arith.constant 0 : index
    %c0_16 = arith.constant 0 : index
    %46 = vector.load %arg5[%c0_15, %c0_16] : memref<8x128xf32, #tpu.memory_space<vmem>>, vector<1x1xf32>
    %47 = vector.shape_cast %37 : vector<16x1xf32> to vector<1x16x1xf32>
    %cst_17 = arith.constant dense<0.000000e+00> : vector<1xf32>
    %48 = vector.multi_reduction <add>, %47, %cst_17 [1, 2] : vector<1x16x1xf32> to vector<1xf32>
    %49 = vector.shape_cast %48 : vector<1xf32> to vector<1x1x1xf32>
    %50 = vector.extract %49[0, 0, 0] : f32 from vector<1x1x1xf32>
    %51 = vector.broadcast %50 : f32 to vector<1x1xf32>
    %52 = arith.addf %46, %51 : vector<1x1xf32>
    %c0_18 = arith.constant 0 : index
    %c0_19 = arith.constant 0 : index
    %53 = vector.load %arg5[%c0_18, %c0_19] : memref<8x128xf32, #tpu.memory_space<vmem>>, vector<1x1xf32>
    tpu.vector_store %arg5[%c0_18, %c0_19], %52 {strides = array<i32>} : memref<8x128xf32, #tpu.memory_space<vmem>>, vector<1x1xf32>,
    return
  }
  func.func @transform_0(%arg0: i32, %arg1: i32) -> (i32, i32) {
    %c1_i32 = arith.constant 1 : i32
    %0 = arith.muli %arg0, %c1_i32 : i32
    %1 = arith.addi %0, %arg1 : i32
    %c0_i32 = arith.constant 0 : i32
    %c0_i32_0 = arith.constant 0 : i32
    return %1, %c0_i32 : i32, i32
  }
  func.func @transform_1(%arg0: i32, %arg1: i32) -> (i32, i32) {
    %c1_i32 = arith.constant 1 : i32
    %0 = arith.muli %arg0, %c1_i32 : i32
    %1 = arith.addi %0, %arg1 : i32
    %c0_i32 = arith.constant 0 : i32
    %c0_i32_0 = arith.constant 0 : i32
    return %1, %c0_i32 : i32, i32
  }
  func.func @transform_2(%arg0: i32, %arg1: i32) -> (i32, i32) {
    %c0_i32 = arith.constant 0 : i32
    %c0_i32_0 = arith.constant 0 : i32
    return %arg0, %c0_i32 : i32, i32
  }
  func.func @transform_3(%arg0: i32, %arg1: i32) -> (i32, i32) {
    %c0_i32 = arith.constant 0 : i32
    %c0_i32_0 = arith.constant 0 : i32
    return %arg0, %c0_i32 : i32, i32
  }
}

</mosaic_0001>

<llo_original>
// kernel: enhanced_reward_aware_loss.1
$region0: #{enhanced_reward_aware_loss.1}
  #allocation0 [shape = 'u32[]', space=smem, size = 0x4, offset = 0x4, fixed_abs, tag = 'smem constant byte address 0x4 - core index']
  #allocation1 [shape = 'u32[144,128]{1,0:T(1,128)}', space=vmem, size = 0x12000, scoped, tag = 'internal scratch']
  %s0 = inlined_call_operand.vmem [shape: f32[16,32], index: 0, kind: input, shape index: {}]
  %s1 = inlined_call_operand.vmem [shape: s32[16,1], index: 1, kind: input, shape index: {}]
  %s2 = inlined_call_operand.vmem [shape: f32[8,128], index: 2, kind: output, shape index: {0}]
  %s3 = inlined_call_operand.vmem [shape: f32[8,128], index: 3, kind: output, shape index: {1}]
  %4 = xla_tuple %s2, %s3
  %s5 = sld [smem:[#allocation0]]
  $region30: #{enhanced_reward_aware_loss.1} parent=0
    _
  %s7 = ssub.s32 1, %s5
  %s8 = scalar_select 0, %s7, %s5
  // Predicated region
  $region2: #{enhanced_reward_aware_loss.1} parent=0 // pred_check
    _
  $region3: #{enhanced_reward_aware_loss.1} parent=0 // pred_check_branch
    %10 = sbr.rel (0) target = $region5
  $region4: #{enhanced_reward_aware_loss.1} parent=0 // pred_region
    %s11 = sadd.s32 0, 0
    %s12 = smul.u32 2, %s11
    %p13 = scmp.lt.s32.totalorder %s12, 1
    %s14 = scalar_select %p13, %s12, 1
    %s15 = smul.addr %s14, 8
    %s16 = scalar_lea.vmem %s0, %s15
    %s17 = sadd.s32 0, 0
    %s18 = smul.u32 2, %s17
  $region5: #{enhanced_reward_aware_loss.1} parent=0 // pred_fallthru
    _
  // Predicated region
  $region6: #{enhanced_reward_aware_loss.1} parent=0 // pred_check
    _
  $region7: #{enhanced_reward_aware_loss.1} parent=0 // pred_check_branch
    %20 = sbr.rel (0) target = $region9
  $region8: #{enhanced_reward_aware_loss.1} parent=0 // pred_region
    %s21 = sadd.s32 0, 0
    %s22 = smul.u32 2, %s21
    %p23 = scmp.lt.s32.totalorder %s22, 1
    %s24 = scalar_select %p23, %s22, 1
    %s25 = smul.addr %s24, 8
    %s26 = scalar_lea.vmem %s1, %s25
    %s27 = sadd.s32 0, 0
    %s28 = smul.u32 2, %s27
  $region9: #{enhanced_reward_aware_loss.1} parent=0 // pred_fallthru
    _
  %s29 = sadd.s32 0, 0
  %s30 = smul.u32 2, %s29
  %p31 = scmp.lt.s32.totalorder %s30, 1
  %s32 = scalar_select %p31, %s30, 1
  %s33 = smul.addr %s32, 8
  %s34 = scalar_lea.vmem %s0, %s33
  %s35 = sadd.s32 0, 0
  %s36 = smul.u32 2, %s35
  %p37 = scmp.lt.s32.totalorder %s36, 1
  %s38 = scalar_select %p37, %s36, 1
  %s39 = smul.addr %s38, 8
  %s40 = scalar_lea.vmem %s1, %s39
  %s41 = sadd.s32 0, 0
  %s42 = smul.u32 2, %s41
  %p43 = scmp.lt.s32.totalorder %s42, 1
  %s44 = scalar_select %p43, %s42, 1
  %s45 = smul.addr %s44, 8
  %s46 = scalar_lea.vmem %s0, %s45
  %s47 = sadd.s32 0, 0
  %s48 = smul.u32 2, %s47
  %s49 = sadd.s32 0, 0
  %s50 = smul.u32 2, %s49
  %p51 = scmp.lt.s32.totalorder %s50, 1
  %s52 = scalar_select %p51, %s50, 1
  %s53 = smul.addr %s52, 8
  %s54 = scalar_lea.vmem %s1, %s53
  %s55 = sadd.s32 0, 0
  %s56 = smul.u32 2, %s55
  %p57 = scmp.eq.s32.totalorder 0, 0
  // Predicated region
  $region10: #{enhanced_reward_aware_loss.1} parent=0 // pred_check
    %p58 = pneg %p57
  $region11: #{enhanced_reward_aware_loss.1} parent=0 // pred_check_branch
    %60 = sbr.rel (%p58) target = $region13
  $region12: #{enhanced_reward_aware_loss.1} parent=0 // pred_region
    %61 = vst [vmem:[%s2] sm:$0xff] 0.0
    %62 = vst [vmem:[%s3] sm:$0xff] 0.0
  $region13: #{enhanced_reward_aware_loss.1} parent=0 // pred_fallthru
    _
  %v63 = vld [vmem:[%s46] sm:$0xff]
  %v64 = vld [vmem:[%s46 + $0x8] sm:$0xff]
  %v65 = vld [vmem:[%s54] sm:$0xff]
  %v66 = vld [vmem:[%s54 + $0x8] sm:$0xff]
  %v67 = vlaneseq
  %v68 = vand.u32 %v67, 127
  %vm69 = vcmask 261120
  %v70 = vsel %vm69, %v63, -inf
  %71 = vmax.xlane.f32.xlu0 %v70
  %v72 = vpop.xlane.xlu0 %71
  %v73 = vsel %vm69, %v64, -inf
  %74 = vmax.xlane.f32.xlu0 %v73
  %v75 = vpop.xlane.xlu0 %74
  %v76 = vsub.f32 %v63, %v72
  %v77 = vsub.f32 %v64, %v75
  %v78 = vmul.f32 %v76, 1.442695
  %v79 = vpow.pop %v78
  %v80 = vmul.f32 %v77, 1.442695
  %v81 = vpow.pop %v80
  %v82 = vsel %vm69, %v79, 0.0
  %83 = vadd.xlane.f32.xlu0 %v82
  %v84 = vpop.xlane.xlu0 %83
  %v85 = vsel %vm69, %v81, 0.0
  %86 = vadd.xlane.f32.xlu0 %v85
  %v87 = vpop.xlane.xlu0 %86
  %v88 = vlog2.pop %v84
  %v89 = vmul.f32 %v88, 0.6931472
  %v90 = vlog2.pop %v87
  %v91 = vmul.f32 %v90, 0.6931472
  %v92 = vadd.f32 %v72, %v89
  %v93 = vadd.f32 %v75, %v91
  %94 = vset.pattern.permute.xlu0 0
  %95 = vperm.xlu0 %94, %v65
  %v96 = vpop.permute.xlu0 %95
  %97 = vset.pattern.permute.xlu0 0
  %98 = vperm.xlu0 %97, %v66
  %v99 = vpop.permute.xlu0 %98
  %vm100 = vcmp.eq.s32.totalorder %v68, %v96
  %vm101 = vcmp.eq.s32.totalorder %v68, %v99
  %v102 = vsel %vm100, %v63, 0.0
  %v103 = vsel %vm101, %v64, 0.0
  %v104 = vsel %vm69, %v102, 0.0
  %105 = vadd.xlane.f32.xlu0 %v104
  %v106 = vpop.xlane.xlu0 %105
  %v107 = vsel %vm69, %v103, 0.0
  %108 = vadd.xlane.f32.xlu0 %v107
  %v109 = vpop.xlane.xlu0 %108
  %vm110 = vcmp.ge.s32.totalorder %v65, 0
  %vm111 = vcmp.ge.s32.totalorder %v66, 0
  %v112 = vsub.f32 %v92, %v106
  %v113 = vsub.f32 %v93, %v109
  %v114 = vsel %vm110, %v112, 0.0
  %v115 = vsel %vm111, %v113, 0.0
  %vm116 = vcmp.eq.f32.partialorder %v63, %v72
  %vm117 = vcmp.eq.f32.partialorder %v64, %v75
  %v118 = vsel %vm116, %v68, 32
  %v119 = vsel %vm117, %v68, 32
  %v120 = vsel %vm69, %v118, 2147483647
  %v121 = vand.u32 %v120, 65535
  %v122 = vshra.s32 %v120, 16
  %v123 = vcvt.s32.f32 %v121
  %v124 = vcvt.s32.f32 %v122
  %125 = vmin.xlane.f32.xlu0 %v124
  %v126 = vpop.xlane.xlu0 %125
  %vm127 = vcmp.eq.f32.partialorder %v124, %v126
  %v128 = vsel %vm127, %v123, inf
  %129 = vmin.xlane.f32.xlu0 %v128
  %v130 = vpop.xlane.xlu0 %129
  %v131 = vcvt.f32.s32 %v130
  %v132 = vcvt.f32.s32 %v126
  %v133 = vshll.u32 %v132, 16
  %v134 = vadd.s32 %v133, %v131
  %v135 = vsel %vm69, %v119, 2147483647
  %v136 = vand.u32 %v135, 65535
  %v137 = vshra.s32 %v135, 16
  %v138 = vcvt.s32.f32 %v136
  %v139 = vcvt.s32.f32 %v137
  %140 = vmin.xlane.f32.xlu0 %v139
  %v141 = vpop.xlane.xlu0 %140
  %vm142 = vcmp.eq.f32.partialorder %v139, %v141
  %v143 = vsel %vm142, %v138, inf
  %144 = vmin.xlane.f32.xlu0 %v143
  %v145 = vpop.xlane.xlu0 %144
  %v146 = vcvt.f32.s32 %v145
  %v147 = vcvt.f32.s32 %v141
  %v148 = vshll.u32 %v147, 16
  %v149 = vadd.s32 %v148, %v146
  %vm150 = vcmp.eq.s32.totalorder %v134, %v65
  %vm151 = vcmp.eq.s32.totalorder %v149, %v66
  %v152 = vsel %vm150, 1, 0
  %v153 = vsel %vm151, 1, 0
  %v154 = vcvt.s32.f32 %v152
  %v155 = vcvt.s32.f32 %v153
  %v156 = vld [vmem:[%s2] sm:$0x1]
  %vm157 = vcmask 7168
  %v158 = vsel %vm157, %v114, 0.0
  %v159 = vsel %vm157, %v115, 0.0
  %v160 = vadd.f32 %v158, %v159
  %161 = vadd.xlane.f32.xlu0 %v160
  %v162 = vpop.xlane.xlu0 %161
  %v163 = vrot.slane %v162, 4
  %v164 = vadd.f32 %v162, %v163
  %v165 = vrot.slane %v164, 2
  %v166 = vadd.f32 %v164, %v165
  %v167 = vrot.slane %v166, 1
  %v168 = vadd.f32 %v166, %v167
  %s169 = vtos %v168
  %v170 = vstv %s169
  %v171 = vadd.f32 %v156, %v170
  %vm172 = vcmask 0
  %173 = vst.msk [vmem:[%s2] sm:$0x1] %vm172, %v171
  %v174 = vld [vmem:[%s3] sm:$0x1]
  %v175 = vsel %vm157, %v154, 0.0
  %v176 = vsel %vm157, %v155, 0.0
  %v177 = vadd.f32 %v175, %v176
  %178 = vadd.xlane.f32.xlu0 %v177
  %v179 = vpop.xlane.xlu0 %178
  %v180 = vrot.slane %v179, 4
  %v181 = vadd.f32 %v179, %v180
  %v182 = vrot.slane %v181, 2
  %v183 = vadd.f32 %v181, %v182
  %v184 = vrot.slane %v183, 1
  %v185 = vadd.f32 %v183, %v184
  %s186 = vtos %v185
  %v187 = vstv %s186
  %v188 = vadd.f32 %v174, %v187
  %189 = vst.msk [vmem:[%s3] sm:$0x1] %vm172, %v188
  // Predicated region
  $region14: #{enhanced_reward_aware_loss.1} parent=0 // pred_check
    _
  $region15: #{enhanced_reward_aware_loss.1} parent=0 // pred_check_branch
    %191 = sbr.rel (0) target = $region17
  $region16: #{enhanced_reward_aware_loss.1} parent=0 // pred_region
    _
  $region17: #{enhanced_reward_aware_loss.1} parent=0 // pred_fallthru
    _
  // Predicated region
  $region18: #{enhanced_reward_aware_loss.1} parent=0 // pred_check
    _
  $region19: #{enhanced_reward_aware_loss.1} parent=0 // pred_check_branch
    %193 = sbr.rel (0) target = $region21
  $region20: #{enhanced_reward_aware_loss.1} parent=0 // pred_region
    _
  $region21: #{enhanced_reward_aware_loss.1} parent=0 // pred_fallthru
    _
  // Predicated region
  $region22: #{enhanced_reward_aware_loss.1} parent=0 // pred_check
    _
  $region23: #{enhanced_reward_aware_loss.1} parent=0 // pred_check_branch
    %195 = sbr.rel (0) target = $region25
  $region24: #{enhanced_reward_aware_loss.1} parent=0 // pred_region
    _
  $region25: #{enhanced_reward_aware_loss.1} parent=0 // pred_fallthru
    _
  // Predicated region
  $region26: #{enhanced_reward_aware_loss.1} parent=0 // pred_check
    _
  $region27: #{enhanced_reward_aware_loss.1} parent=0 // pred_check_branch
    %197 = sbr.rel (0) target = $region29
  $region28: #{enhanced_reward_aware_loss.1} parent=0 // pred_region
    _
  $region29: #{enhanced_reward_aware_loss.1} parent=0 // pred_fallthru
    _

</llo_original>
